<compile_context>
chip_gen: v6e
topology: v6e:2x2x1
jax: 0.10.0
libtpu: 0.0.40
codegen_flags: <defaults>
</compile_context>

<pallas_src>
import math

import jax
import jax.numpy as jnp
from jax.experimental import pallas as pl
from jax.experimental.pallas import tpu as pltpu

_LANE = 128
_MAX_FOLD_W = 1024


def rbf_kernel(x_ref, c_ref, a_ref, b_ref, o_ref):
    # x_ref: (TR, W); c_ref / a_ref / b_ref: (1, W) resident parameter rows.
    x = x_ref[...].astype(jnp.float32)
    d = x - c_ref[...]                       # broadcast (1, W) -> (TR, W)
    # y = exp(a*d^2 + b), a = -1/(2*sigma^2), b = -0.5*log(2*pi*sigma^2)
    o_ref[...] = jnp.exp(d * d * a_ref[...] + b_ref[...]).astype(o_ref.dtype)


def _round_up(v, m):
    return -(-v // m) * m


def rbf_activation(x, centers, log_sigma2, *, target_block_bytes=4 << 20):
    """x: (..., F); centers, log_sigma2: (F,)."""
    orig_shape = x.shape
    F = orig_shape[-1]
    assert centers.shape == (F,) and log_sigma2.shape == (F,)

    # ---- O(F) parameter prep in XLA (hoisted out of the per-tile kernel body)
    ls2 = log_sigma2.astype(jnp.float32)
    a = -0.5 * jnp.exp(-ls2)                                  # -1 / (2*sigma^2)
    b = -0.5 * (jnp.log(jnp.float32(2.0 * math.pi)) + ls2)    # -0.5*log(2*pi*s2)
    c = centers.astype(jnp.float32)

    x2 = x.reshape(-1, F)
    B = x2.shape[0]

    # ---- lane-densify: fold rows into a full-lane width W = lcm(F, 128) when
    # it is free (no pad / no slice), i.e. the row count divides evenly.
    W, rep = F, 1
    if F % _LANE != 0:
        lcm = F * _LANE // math.gcd(F, _LANE)
        if lcm <= _MAX_FOLD_W and B % (lcm // F) == 0:
            W, rep = lcm, lcm // F

    if rep > 1:
        xw = x2.reshape(-1, W)
        c_row = jnp.tile(c, rep).reshape(1, W)
        a_row = jnp.tile(a, rep).reshape(1, W)
        b_row = jnp.tile(b, rep).reshape(1, W)
    else:
        xw = x2
        c_row = c.reshape(1, W)
        a_row = a.reshape(1, W)
        b_row = b.reshape(1, W)

    R = xw.shape[0]
    itemsize = jnp.dtype(x.dtype).itemsize
    sub_mult = max(8, 32 // itemsize)          # 8 f32, 16 bf16, 32 for 8-bit

    # ---- byte-budgeted batch tile (scales with W; in+out double buffers stay
    # far below v7x's 64 MiB VMEM), rounded to the packed-sublane multiple.
    budget_rows = max(
        sub_mult,
        (target_block_bytes // max(1, W * itemsize)) // sub_mult * sub_mult,
    )

    if R <= budget_rows and R <= 2 * sub_mult:
        # Tiny input: one block exactly equal to the array (always layout-legal).
        tile_rows = R
    else:
        tile_rows = budget_rows
        if R > sub_mult:
            # >= 2 grid steps so v7x's two TensorCores both get work.
            tile_rows = min(tile_rows, _round_up((R + 1) // 2, sub_mult))
        tile_rows = min(tile_rows, _round_up(R, sub_mult))
        tile_rows = max(sub_mult, tile_rows)

    grid = (pl.cdiv(R, tile_rows),)
    n_elem = R * W

    out = pl.pallas_call(
        rbf_kernel,
        out_shape=jax.ShapeDtypeStruct((R, W), x.dtype),
        grid_spec=pltpu.PrefetchScalarGridSpec(
            num_scalar_prefetch=0,
            grid=grid,
            in_specs=[
                pl.BlockSpec((tile_rows, W), lambda i: (i, 0)),  # x tile
                pl.BlockSpec((1, W), lambda i: (0, 0)),          # centers row
                pl.BlockSpec((1, W), lambda i: (0, 0)),          # -1/(2*s2) row
                pl.BlockSpec((1, W), lambda i: (0, 0)),          # -0.5*log(2*pi*s2)
            ],
            out_specs=pl.BlockSpec((tile_rows, W), lambda i: (i, 0)),
        ),
        compiler_params=pltpu.CompilerParams(
            dimension_semantics=("parallel",),   # shard grid across TCs on v7x
            vmem_limit_bytes=40 << 20,           # fits v7x 64 MiB, > scoped defaults
        ),
        cost_estimate=pl.CostEstimate(
            flops=4 * n_elem,
            transcendentals=n_elem,
            bytes_accessed=2 * n_elem * itemsize + 3 * W * 4,
        ),
    )(xw, c_row, a_row, b_row)

    # Reshape only (no pad was added, so no slicing needed).
    return out.reshape(orig_shape)


def rbf_reference(x, centers, log_sigma2):
    s2 = jnp.exp(log_sigma2)
    diff = x - centers
    return 1.0 / jnp.sqrt(2.0 * jnp.pi * s2) * jnp.exp(-(diff * diff) / (2.0 * s2))


if __name__ == "__main__":
    key = jax.random.PRNGKey(0)

    # Parameters matching the PyTorch __init__ (deterministic).
    F = 32
    centers = jnp.ones((F,), dtype=jnp.float32)
    log_sigma2 = jnp.ones((F,), dtype=jnp.float32) * -0.2

    # Case 1: (batch, features), rows fold evenly into 128 lanes.
    x1 = jax.random.normal(key, (16, F), dtype=jnp.float32)
    out1 = jax.block_until_ready(rbf_activation(x1, centers, log_sigma2))
    ref1 = rbf_reference(x1, centers, log_sigma2)
    assert out1.shape == x1.shape and out1.dtype == x1.dtype
    assert jnp.allclose(out1, ref1, atol=1e-5, rtol=1e-5)

    # Case 2: leading dims, row count NOT divisible by the fold factor
    # -> W = F fallback path with a ragged last grid block (no padding).
    x2 = jax.random.normal(jax.random.PRNGKey(1), (6, 5, F), dtype=jnp.float32)
    out2 = jax.block_until_ready(rbf_activation(x2, centers, log_sigma2))
    ref2 = rbf_reference(x2, centers, log_sigma2)
    assert out2.shape == x2.shape
    assert jnp.allclose(out2, ref2, atol=1e-5, rtol=1e-5)

    # Case 3: F not dividing 128 -> generalized lcm(F, 128) fold (W = 384).
    F3 = 48
    centers3 = jnp.ones((F3,), dtype=jnp.float32)
    log_sigma2_3 = jnp.ones((F3,), dtype=jnp.float32) * -0.2
    x3 = jax.random.normal(jax.random.PRNGKey(2), (16, F3), dtype=jnp.float32)
    out3 = jax.block_until_ready(rbf_activation(x3, centers3, log_sigma2_3))
    ref3 = rbf_reference(x3, centers3, log_sigma2_3)
    assert out3.shape == x3.shape
    assert jnp.allclose(out3, ref3, atol=1e-5, rtol=1e-5)

    print("KERNEL_OK")
</pallas_src>

<mosaic_0001>
module attributes {stable_mosaic.version = 11 : i64} {
  func.func @rbf_kernel(%arg0: i32, %arg1: memref<4x128xf32, #tpu.memory_space<vmem>>, %arg2: memref<1x128xf32, #tpu.memory_space<vmem>>, %arg3: memref<1x128xf32, #tpu.memory_space<vmem>>, %arg4: memref<1x128xf32, #tpu.memory_space<vmem>>, %arg5: memref<4x128xf32, #tpu.memory_space<vmem>>) attributes {dimension_semantics = [#tpu.dimension_semantics<parallel>], iteration_bounds = array<i64: 1>, scalar_prefetch = 0 : i64, scratch_operands = 0 : i64, tpu.core_type = #tpu.core_type<tc>, window_params = [{transform_indices = @transform_0, window_bounds = array<i64: 4, 128>}, {pipeline_mode = #tpu.pipeline_mode<synchronous>, transform_indices = @transform_1, window_bounds = array<i64: 1, 128>}, {pipeline_mode = #tpu.pipeline_mode<synchronous>, transform_indices = @transform_2, window_bounds = array<i64: 1, 128>}, {pipeline_mode = #tpu.pipeline_mode<synchronous>, transform_indices = @transform_3, window_bounds = array<i64: 1, 128>}, {transform_indices = @transform_4, window_bounds = array<i64: 4, 128>}]} {
    %c0 = arith.constant 0 : index
    %c0_0 = arith.constant 0 : index
    %0 = vector.load %arg1[%c0, %c0_0] : memref<4x128xf32, #tpu.memory_space<vmem>>, vector<4x128xf32>
    %c0_1 = arith.constant 0 : index
    %c0_2 = arith.constant 0 : index
    %1 = vector.load %arg2[%c0_1, %c0_2] : memref<1x128xf32, #tpu.memory_space<vmem>>, vector<1x128xf32>
    %2 = vector.broadcast %1 : vector<1x128xf32> to vector<4x128xf32>
    %3 = arith.subf %0, %2 : vector<4x128xf32>
    %4 = arith.mulf %3, %3 : vector<4x128xf32>
    %c0_3 = arith.constant 0 : index
    %c0_4 = arith.constant 0 : index
    %5 = vector.load %arg3[%c0_3, %c0_4] : memref<1x128xf32, #tpu.memory_space<vmem>>, vector<1x128xf32>
    %6 = vector.broadcast %5 : vector<1x128xf32> to vector<4x128xf32>
    %7 = arith.mulf %4, %6 : vector<4x128xf32>
    %c0_5 = arith.constant 0 : index
    %c0_6 = arith.constant 0 : index
    %8 = vector.load %arg4[%c0_5, %c0_6] : memref<1x128xf32, #tpu.memory_space<vmem>>, vector<1x128xf32>
    %9 = vector.broadcast %8 : vector<1x128xf32> to vector<4x128xf32>
    %10 = arith.addf %7, %9 : vector<4x128xf32>
    %11 = math.exp %10 : vector<4x128xf32>
    %c0_7 = arith.constant 0 : index
    %c0_8 = arith.constant 0 : index
    %12 = vector.load %arg5[%c0_7, %c0_8] : memref<4x128xf32, #tpu.memory_space<vmem>>, vector<4x128xf32>
    tpu.vector_store %arg5[%c0_7, %c0_8], %11 {strides = array<i32>} : memref<4x128xf32, #tpu.memory_space<vmem>>, vector<4x128xf32>,
    return
  }
  func.func @transform_0(%arg0: i32) -> (i32, i32) {
    %c0_i32 = arith.constant 0 : i32
    %c0_i32_0 = arith.constant 0 : i32
    return %arg0, %c0_i32 : i32, i32
  }
  func.func @transform_1(%arg0: i32) -> (i32, i32) {
    %c0_i32 = arith.constant 0 : i32
    %c0_i32_0 = arith.constant 0 : i32
    %c0_i32_1 = arith.constant 0 : i32
    return %c0_i32, %c0_i32_0 : i32, i32
  }
  func.func @transform_2(%arg0: i32) -> (i32, i32) {
    %c0_i32 = arith.constant 0 : i32
    %c0_i32_0 = arith.constant 0 : i32
    %c0_i32_1 = arith.constant 0 : i32
    return %c0_i32, %c0_i32_0 : i32, i32
  }
  func.func @transform_3(%arg0: i32) -> (i32, i32) {
    %c0_i32 = arith.constant 0 : i32
    %c0_i32_0 = arith.constant 0 : i32
    %c0_i32_1 = arith.constant 0 : i32
    return %c0_i32, %c0_i32_0 : i32, i32
  }
  func.func @transform_4(%arg0: i32) -> (i32, i32) {
    %c0_i32 = arith.constant 0 : i32
    %c0_i32_0 = arith.constant 0 : i32
    return %arg0, %c0_i32 : i32, i32
  }
}

</mosaic_0001>

<llo_original>
// kernel: tpu_custom_call.1
$region0: #{tpu_custom_call.1}
  #allocation0 [shape = 'u32[]', space=smem, size = 0x4, offset = 0x4, fixed_abs, tag = 'smem constant byte address 0x4 - core index']
  #allocation1 [shape = 'u32[144,128]{1,0:T(1,128)}', space=vmem, size = 0x12000, scoped, tag = 'internal scratch']
  %s0 = inlined_call_operand.hbm [shape: f32[4,128], index: 0, kind: input, shape index: {}]
  %s1 = inlined_call_operand.vmem [shape: f32[1,128], index: 1, kind: input, shape index: {}]
  %s2 = inlined_call_operand.vmem [shape: f32[1,128], index: 2, kind: input, shape index: {}]
  %s3 = inlined_call_operand.vmem [shape: f32[1,128], index: 3, kind: input, shape index: {}]
  %s4 = inlined_call_operand.hbm [shape: f32[4,128], index: 4, kind: output, shape index: {}]
  %s5 = sld [smem:[#allocation0]]
  $region30: #{tpu_custom_call.1} parent=0
    _
  %s7 = ssub.s32 1, %s5
  %s8 = scalar_select 0, %s7, %s5
  $region1: #{tpu_custom_call.1} parent=0
    #allocation2 [shape = 'u8[2048]{0}', space=vmem, size = 0x800, scoped, tag = 'input window, operand 0, single buffered']
    #allocation3 [shape = 's32[1]{0}', space=sflag, size = 0x4, scoped, tag = 'scoped memory for tpu_custom_call.1']
    #allocation4 [shape = 's32[1]{0}', space=sflag, size = 0x4, scoped, tag = 'scoped memory for tpu_custom_call.1']
    #allocation5 [shape = 'u8[2048]{0}', space=vmem, size = 0x800, scoped, tag = 'output window, operand 0, single buffered']
    %9 = vsyncpa [#allocation3], 0
    %10 = vsyncpa [#allocation4], 0
    // Predicated region
    $region2: #{tpu_custom_call.1} parent=1 // pred_check
      _
    $region3: #{tpu_custom_call.1} parent=1 // pred_check_branch
      %12 = sbr.rel (0) target = $region5
    $region4: #{tpu_custom_call.1} parent=1 // pred_region
      %s14 = ssub.s32 64, 64
      %15 = vsyncadd [#allocation3], %s14
      %s17 = sshll.u32 [#allocation2], 4
      %s18 = int_to_ptr.vmem [resolvable:$true] %s17
      %20 = dma.hbm_to_vmem [thread:$0]  %s0, 64, %s18, [#allocation3]
    $region5: #{tpu_custom_call.1} parent=1 // pred_fallthru
      _
    // Predicated region
    $region6: #{tpu_custom_call.1} parent=1 // pred_check
      _
    $region7: #{tpu_custom_call.1} parent=1 // pred_check_branch
      %22 = sbr.rel (0) target = $region9
    $region8: #{tpu_custom_call.1} parent=1 // pred_region
      _
    $region9: #{tpu_custom_call.1} parent=1 // pred_fallthru
      _
    // Predicated region
    $region10: #{tpu_custom_call.1} parent=1 // pred_check
      _
    $region11: #{tpu_custom_call.1} parent=1 // pred_check_branch
      %24 = sbr.rel (0) target = $region13
    $region12: #{tpu_custom_call.1} parent=1 // pred_region
      _
    $region13: #{tpu_custom_call.1} parent=1 // pred_fallthru
      _
    // Predicated region
    $region14: #{tpu_custom_call.1} parent=1 // pred_check
      _
    $region15: #{tpu_custom_call.1} parent=1 // pred_check_branch
      %26 = sbr.rel (0) target = $region17
    $region16: #{tpu_custom_call.1} parent=1 // pred_region
      _
    $region17: #{tpu_custom_call.1} parent=1 // pred_fallthru
      _
    // Predicated region
    $region18: #{tpu_custom_call.1} parent=1 // pred_check
      _
    $region19: #{tpu_custom_call.1} parent=1 // pred_check_branch
      %28 = sbr.rel (0) target = $region21
    $region20: #{tpu_custom_call.1} parent=1 // pred_region
      %29 = dma.done [#allocation3], 64
    $region21: #{tpu_custom_call.1} parent=1 // pred_fallthru
      _
    %v30 = vld [vmem:[#allocation2] sm:$0xf]
    %v31 = vld [vmem:[%s1] sm:$0x1]
    %v33 = vlaneseq
    %v34 = vshrl.u32 %v33, 7
    %v35 = vsub.s32 0, %v34
    %v36 = vrot.slane %v31, %v35
    %v38 = vsub.f32 %v30, %v36
    %v39 = vmul.f32 %v38, %v38
    %v40 = vld [vmem:[%s2] sm:$0x1]
    %v42 = vlaneseq
    %v43 = vshrl.u32 %v42, 7
    %v44 = vsub.s32 0, %v43
    %v45 = vrot.slane %v40, %v44
    %v47 = vmul.f32 %v39, %v45
    %v48 = vld [vmem:[%s3] sm:$0x1]
    %v50 = vlaneseq
    %v51 = vshrl.u32 %v50, 7
    %v52 = vsub.s32 0, %v51
    %v53 = vrot.slane %v48, %v52
    %v55 = vadd.f32 %v47, %v53
    %v56 = vmul.f32 %v55, 1.442695
    %v57 = vpow.pop %v56
    %58 = vst [vmem:[#allocation5] sm:$0xf] %v57
    // Predicated region
    $region22: #{tpu_custom_call.1} parent=1 // pred_check
      _
    $region23: #{tpu_custom_call.1} parent=1 // pred_check_branch
      %60 = sbr.rel (0) target = $region25
    $region24: #{tpu_custom_call.1} parent=1 // pred_region
      %s62 = ssub.s32 64, 64
      %63 = vsyncadd [#allocation4], %s62
      %s65 = sshll.u32 [#allocation5], 4
      %s66 = int_to_ptr.vmem [resolvable:$true] %s65
      %68 = dma.vmem_to_hbm [thread:$0]  %s66, 64, %s4, [#allocation4]
    $region25: #{tpu_custom_call.1} parent=1 // pred_fallthru
      _
    // Predicated region
    $region26: #{tpu_custom_call.1} parent=1 // pred_check
      _
    $region27: #{tpu_custom_call.1} parent=1 // pred_check_branch
      %70 = sbr.rel (0) target = $region29
    $region28: #{tpu_custom_call.1} parent=1 // pred_region
      %71 = dma.done [#allocation4], 64
    $region29: #{tpu_custom_call.1} parent=1 // pred_fallthru
      _
    %72 = vsyncpa [#allocation3], 1
    %73 = vsyncpa [#allocation4], 1

</llo_original>
